<compile_context>
chip_gen: v7x
topology: tpu7x:2x2x1
jax: 0.10.0
libtpu: 0.0.40
codegen_flags: <defaults>
</compile_context>

<pallas_src>
import functools

import jax
import jax.numpy as jnp
from jax import lax
from jax.experimental import pallas as pl
from jax.experimental.pallas import tpu as pltpu


def _round_up(x, m):
    return ((x + m - 1) // m) * m


def _readout_kernel(h_ref, thresh_ref, w1_ref, b1_ref, w2_ref, b2_ref, out_ref):
    """Per-batch-tile body: masked sum pooling + 2-layer MLP w/ LeakyReLU.

    h_ref      : (TB, NG, W)     bf16/f32 node hidden states, lane-dense
                                 (W = k*H, node group g holds nodes g*k..g*k+k-1)
    thresh_ref : (TB, NG, 1)     int32    per-group lane threshold:
                                 lane l valid iff l < (count - g*k)*H
    w1_ref     : (W, R_pad)      f32      w1 tiled k times vertically
    b1_ref     : (1, R_pad)      f32
    w2_ref     : (R_pad, T_pad)  f32
    b2_ref     : (1, T_pad)      f32
    out_ref    : (TB, T_pad)     f32      graph-level predictions (lane-dense)
    """
    tb, ng, w = h_ref.shape

    # Padding mask: one iota + compare + select on the lane-dense bf16 tile
    # (no full-tile f32 copy, no full-size node-id arithmetic chain).
    lane = lax.broadcasted_iota(jnp.int32, (tb, ng, w), 2)
    hm = jnp.where(lane < thresh_ref[...], h_ref[...], 0.0)          # (TB,NG,W) bf16

    # Masked sum pooling over the node-group axis, f32 accumulation.
    pooled = jnp.sum(hm, axis=1, dtype=jnp.float32)                  # (TB, W) f32

    # Hidden layer: Linear + LeakyReLU(0.01).  w1 is tiled k times vertically,
    # so the MXU folds the k lane segments back onto H for free.
    z = jnp.dot(pooled, w1_ref[...], preferred_element_type=jnp.float32)
    z = z + b1_ref[...]                                              # (TB, R_pad)
    z = jnp.where(z > 0, z, 0.01 * z)                                # LeakyReLU

    # Output layer: Linear (lane-dense padded T).
    y = jnp.dot(z, w2_ref[...], preferred_element_type=jnp.float32)
    y = y + b2_ref[...]                                              # (TB, T_pad)

    out_ref[...] = y.astype(out_ref.dtype)


def _pick_batch_tile(B, row_bytes, budget_bytes, max_batch_tile):
    """Largest batch tile fitting the per-buffer VMEM budget (v7x-safe)."""
    cap = max(1, budget_bytes // max(row_bytes, 1))
    cap = min(cap, max_batch_tile)
    if B <= cap:
        # Whole batch fits one tile; split in two (keeping the output-block
        # multiple-of-8 constraint) so v7x's two TensorCores both get work.
        if B >= 16 and B % 16 == 0:
            return B // 2
        return B
    # Multiple tiles: multiple of 8 (output block second-to-last dim), <= B.
    return min(max(8, (cap // 8) * 8), B)


def readout_forward(h, node_counts, w1, b1, w2, b2, *, max_batch_tile=1024):
    """Pallas wrapper.

    h           : (B, N, H)  bf16 or f32 node hidden states
    node_counts : (B,)       int   number of real (non-padded) nodes per graph
    w1, b1      : (H, R), (1, R)   f32
    w2, b2      : (R, T), (1, T)   f32
    returns     : (B, T)     f32
    """
    B, N, H = h.shape
    R = w1.shape[1]
    T = w2.shape[1]
    assert w1.shape[0] == H and w2.shape[0] == R
    assert node_counts.shape == (B,)

    # --- Lane-dense layout for h when H < 128 (biggest lever for small H).
    if H < 128 and 128 % H == 0 and N % (128 // H) == 0:
        k = 128 // H
    else:
        k = 1
    NG = N // k
    W = k * H
    h2 = h.reshape(B, NG, W)          # contiguous reshape: layout plumbing only

    # Per-(graph, node-group) lane threshold: lane l of group g is a real node
    # iff g*k + l//H < count  <=>  l < (count - g*k) * H.
    g_base = jnp.arange(NG, dtype=jnp.int32) * k                    # (NG,)
    thresh = ((node_counts.astype(jnp.int32)[:, None] - g_base[None, :]) * H)
    thresh = thresh[:, :, None]                                     # (B, NG, 1)

    # Lane-dense padding for the MLP dims (tiny arrays; keeps stores unmasked).
    R_pad = _round_up(R, 128)
    T_pad = _round_up(T, 128)

    # w1 tiled k times vertically so the MXU folds lane segments back onto H.
    w1r = jnp.tile(w1.astype(jnp.float32), (k, 1))                   # (W, R)
    w1_p = jnp.pad(w1r, ((0, 0), (0, R_pad - R)))
    b1_p = jnp.pad(b1.reshape(1, R).astype(jnp.float32), ((0, 0), (0, R_pad - R)))
    w2_p = jnp.pad(w2.astype(jnp.float32), ((0, R_pad - R), (0, T_pad - T)))
    b2_p = jnp.pad(b2.reshape(1, T).astype(jnp.float32), ((0, 0), (0, T_pad - T)))

    # --- Batch tile: conservative per-buffer budget so the double-buffered
    # bf16 tile plus in-kernel temporaries fit v7x's 32 MiB scoped VMEM.
    itemsize = jnp.dtype(h.dtype).itemsize
    row_bytes = _round_up(NG, 8) * _round_up(W, 128) * itemsize
    budget_per_buffer = 3 * 1024 * 1024
    tb = _pick_batch_tile(B, row_bytes, budget_per_buffer, max_batch_tile)

    grid = (pl.cdiv(B, tb),)

    out = pl.pallas_call(
        _readout_kernel,
        out_shape=jax.ShapeDtypeStruct((B, T_pad), jnp.float32),
        grid_spec=pltpu.PrefetchScalarGridSpec(
            num_scalar_prefetch=0,
            grid=grid,
            in_specs=[
                # Pipelined batch tiles of h (the only large HBM stream).
                pl.BlockSpec((tb, NG, W), lambda i: (i, 0, 0)),
                # Per-tile lane thresholds (tiny).
                pl.BlockSpec((tb, NG, 1), lambda i: (i, 0, 0)),
                # Weights/biases: same block every grid step -> stay resident.
                pl.BlockSpec((W, R_pad), lambda i: (0, 0)),
                pl.BlockSpec((1, R_pad), lambda i: (0, 0)),
                pl.BlockSpec((R_pad, T_pad), lambda i: (0, 0)),
                pl.BlockSpec((1, T_pad), lambda i: (0, 0)),
            ],
            out_specs=pl.BlockSpec((tb, T_pad), lambda i: (i, 0)),
        ),
        compiler_params=pltpu.CompilerParams(
            dimension_semantics=("parallel",),      # shards batch across TCs on v7x
            vmem_limit_bytes=32 * 1024 * 1024,      # fits v7x scoped-VMEM default
        ),
    )(h2, thresh, w1_p, b1_p, w2_p, b2_p)

    return out[:B, :T]


def reference_forward(h, node_counts, w1, b1, w2, b2):
    B, N, H = h.shape
    mask = (jnp.arange(N)[None, :] < node_counts[:, None]).astype(jnp.float32)
    pooled = jnp.sum(h.astype(jnp.float32) * mask[:, :, None], axis=1)
    z = jnp.dot(pooled, w1, precision=jax.lax.Precision.HIGHEST) + b1
    z = jnp.where(z > 0, z, 0.01 * z)
    return jnp.dot(z, w2, precision=jax.lax.Precision.HIGHEST) + b2


if __name__ == "__main__":
    # Config implied by the module: mode, hidden_dim, readout_hidden_dim, target_dim.
    batch = 2
    num_nodes = 8
    hidden_dim = 32
    readout_hidden_dim = 32
    target_dim = 4

    key = jax.random.PRNGKey(0)
    k_h, k_w1, k_b1, k_w2, k_b2 = jax.random.split(key, 5)

    # Node hidden states produced by the message-passing trunk (bf16 to halve
    # HBM traffic; kernel accumulates in f32).
    h = jax.random.normal(
        k_h, (batch, num_nodes, hidden_dim), dtype=jnp.float32
    ).astype(jnp.bfloat16)

    # Deterministic node counts: first graph has 8 real nodes, second has 5.
    node_counts = jnp.array([8, 5], dtype=jnp.int32)

    # Deterministic parameter init (synthetic weights, not a checkpoint).
    w1 = jax.random.normal(k_w1, (hidden_dim, readout_hidden_dim), dtype=jnp.float32) * 0.1
    b1 = jax.random.normal(k_b1, (1, readout_hidden_dim), dtype=jnp.float32) * 0.1
    w2 = jax.random.normal(k_w2, (readout_hidden_dim, target_dim), dtype=jnp.float32) * 0.1
    b2 = jax.random.normal(k_b2, (1, target_dim), dtype=jnp.float32) * 0.1

    out = readout_forward(h, node_counts, w1, b1, w2, b2)
    out = jax.block_until_ready(out)

    ref = reference_forward(h, node_counts, w1, b1, w2, b2)
    assert out.shape == (batch, target_dim), out.shape
    assert jnp.allclose(out, ref, atol=1e-4, rtol=1e-4), (out, ref)

    print("KERNEL_OK")
</pallas_src>

<mosaic_0001>
module attributes {stable_mosaic.version = 11 : i64} {
  func.func @_readout_kernel(%arg0: i32, %arg1: memref<2x2x128xbf16, #tpu.memory_space<vmem>>, %arg2: memref<2x2x1xi32, #tpu.memory_space<vmem>>, %arg3: memref<128x128xf32, #tpu.memory_space<vmem>>, %arg4: memref<1x128xf32, #tpu.memory_space<vmem>>, %arg5: memref<128x128xf32, #tpu.memory_space<vmem>>, %arg6: memref<1x128xf32, #tpu.memory_space<vmem>>, %arg7: memref<2x128xf32, #tpu.memory_space<vmem>>) attributes {dimension_semantics = [#tpu.dimension_semantics<parallel>], iteration_bounds = array<i64: 1>, scalar_prefetch = 0 : i64, scratch_operands = 0 : i64, tpu.core_type = #tpu.core_type<tc>, window_params = [{transform_indices = @transform_0, window_bounds = array<i64: 2, 2, 128>}, {transform_indices = @transform_1, window_bounds = array<i64: 2, 2, 1>}, {pipeline_mode = #tpu.pipeline_mode<synchronous>, transform_indices = @transform_2, window_bounds = array<i64: 128, 128>}, {pipeline_mode = #tpu.pipeline_mode<synchronous>, transform_indices = @transform_3, window_bounds = array<i64: 1, 128>}, {pipeline_mode = #tpu.pipeline_mode<synchronous>, transform_indices = @transform_4, window_bounds = array<i64: 128, 128>}, {pipeline_mode = #tpu.pipeline_mode<synchronous>, transform_indices = @transform_5, window_bounds = array<i64: 1, 128>}, {transform_indices = @transform_6, window_bounds = array<i64: 2, 128>}]} {
    %0 = tpu.iota {dimensions = array<i32: 2>} : vector<2x2x128xi32>
    %c0 = arith.constant 0 : index
    %c0_0 = arith.constant 0 : index
    %c0_1 = arith.constant 0 : index
    %1 = vector.load %arg2[%c0, %c0_0, %c0_1] : memref<2x2x1xi32, #tpu.memory_space<vmem>>, vector<2x2x1xi32>
    %2 = vector.broadcast %1 : vector<2x2x1xi32> to vector<2x2x128xi32>
    %3 = arith.cmpi slt, %0, %2 : vector<2x2x128xi32>
    %c0_2 = arith.constant 0 : index
    %c0_3 = arith.constant 0 : index
    %c0_4 = arith.constant 0 : index
    %4 = vector.load %arg1[%c0_2, %c0_3, %c0_4] : memref<2x2x128xbf16, #tpu.memory_space<vmem>>, vector<2x2x128xbf16>
    %cst = arith.constant 0.000000e+00 : f32
    %5 = arith.truncf %cst : f32 to bf16
    %6 = vector.broadcast %5 : bf16 to vector<2x2x128xbf16>
    %7 = arith.select %3, %4, %6 : vector<2x2x128xi1>, vector<2x2x128xbf16>
    %8 = arith.extf %7 : vector<2x2x128xbf16> to vector<2x2x128xf32>
    %cst_5 = arith.constant dense<0.000000e+00> : vector<2x128xf32>
    %9 = vector.multi_reduction <add>, %8, %cst_5 [1] : vector<2x2x128xf32> to vector<2x128xf32>
    %c0_6 = arith.constant 0 : index
    %c0_7 = arith.constant 0 : index
    %10 = vector.load %arg3[%c0_6, %c0_7] : memref<128x128xf32, #tpu.memory_space<vmem>>, vector<128x128xf32>
    %cst_8 = arith.constant dense<0.000000e+00> : vector<2x128xf32>
    %11 = tpu.matmul %9, %10, %cst_8 {dimension_numbers = #tpu.dot_dimension_numbers<[1], [0], [0], [1], [0, 0, 1, 1], [], []>} : vector<2x128xf32>, vector<128x128xf32>, vector<2x128xf32> -> vector<2x128xf32>
    %c0_9 = arith.constant 0 : index
    %c0_10 = arith.constant 0 : index
    %12 = vector.load %arg4[%c0_9, %c0_10] : memref<1x128xf32, #tpu.memory_space<vmem>>, vector<1x128xf32>
    %13 = vector.broadcast %12 : vector<1x128xf32> to vector<2x128xf32>
    %14 = arith.addf %11, %13 : vector<2x128xf32>
    %cst_11 = arith.constant 0.000000e+00 : f32
    %15 = vector.broadcast %cst_11 : f32 to vector<2x128xf32>
    %16 = arith.cmpf ogt, %14, %15 : vector<2x128xf32>
    %cst_12 = arith.constant 0.00999999977 : f32
    %17 = vector.broadcast %cst_12 : f32 to vector<2x128xf32>
    %18 = arith.mulf %17, %14 : vector<2x128xf32>
    %19 = arith.select %16, %14, %18 : vector<2x128xi1>, vector<2x128xf32>
    %c0_13 = arith.constant 0 : index
    %c0_14 = arith.constant 0 : index
    %20 = vector.load %arg5[%c0_13, %c0_14] : memref<128x128xf32, #tpu.memory_space<vmem>>, vector<128x128xf32>
    %cst_15 = arith.constant dense<0.000000e+00> : vector<2x128xf32>
    %21 = tpu.matmul %19, %20, %cst_15 {dimension_numbers = #tpu.dot_dimension_numbers<[1], [0], [0], [1], [0, 0, 1, 1], [], []>} : vector<2x128xf32>, vector<128x128xf32>, vector<2x128xf32> -> vector<2x128xf32>
    %c0_16 = arith.constant 0 : index
    %c0_17 = arith.constant 0 : index
    %22 = vector.load %arg6[%c0_16, %c0_17] : memref<1x128xf32, #tpu.memory_space<vmem>>, vector<1x128xf32>
    %23 = vector.broadcast %22 : vector<1x128xf32> to vector<2x128xf32>
    %24 = arith.addf %21, %23 : vector<2x128xf32>
    %c0_18 = arith.constant 0 : index
    %c0_19 = arith.constant 0 : index
    %25 = vector.load %arg7[%c0_18, %c0_19] : memref<2x128xf32, #tpu.memory_space<vmem>>, vector<2x128xf32>
    tpu.vector_store %arg7[%c0_18, %c0_19], %24 {strides = array<i32>} : memref<2x128xf32, #tpu.memory_space<vmem>>, vector<2x128xf32>,
    return
  }
  func.func @transform_0(%arg0: i32) -> (i32, i32, i32) {
    %c0_i32 = arith.constant 0 : i32
    %c0_i32_0 = arith.constant 0 : i32
    %c0_i32_1 = arith.constant 0 : i32
    return %arg0, %c0_i32, %c0_i32_0 : i32, i32, i32
  }
  func.func @transform_1(%arg0: i32) -> (i32, i32, i32) {
    %c0_i32 = arith.constant 0 : i32
    %c0_i32_0 = arith.constant 0 : i32
    %c0_i32_1 = arith.constant 0 : i32
    return %arg0, %c0_i32, %c0_i32_0 : i32, i32, i32
  }
  func.func @transform_2(%arg0: i32) -> (i32, i32) {
    %c0_i32 = arith.constant 0 : i32
    %c0_i32_0 = arith.constant 0 : i32
    %c0_i32_1 = arith.constant 0 : i32
    return %c0_i32, %c0_i32_0 : i32, i32
  }
  func.func @transform_3(%arg0: i32) -> (i32, i32) {
    %c0_i32 = arith.constant 0 : i32
    %c0_i32_0 = arith.constant 0 : i32
    %c0_i32_1 = arith.constant 0 : i32
    return %c0_i32, %c0_i32_0 : i32, i32
  }
  func.func @transform_4(%arg0: i32) -> (i32, i32) {
    %c0_i32 = arith.constant 0 : i32
    %c0_i32_0 = arith.constant 0 : i32
    %c0_i32_1 = arith.constant 0 : i32
    return %c0_i32, %c0_i32_0 : i32, i32
  }
  func.func @transform_5(%arg0: i32) -> (i32, i32) {
    %c0_i32 = arith.constant 0 : i32
    %c0_i32_0 = arith.constant 0 : i32
    %c0_i32_1 = arith.constant 0 : i32
    return %c0_i32, %c0_i32_0 : i32, i32
  }
  func.func @transform_6(%arg0: i32) -> (i32, i32) {
    %c0_i32 = arith.constant 0 : i32
    %c0_i32_0 = arith.constant 0 : i32
    return %arg0, %c0_i32 : i32, i32
  }
}

</mosaic_0001>

<llo_original>
// kernel: tpu_custom_call.1
$region0: #{tpu_custom_call.1}
  #allocation0 [shape = 'u32[]', space=smem, size = 0x4, offset = 0x4, fixed_abs, tag = 'smem constant byte address 0x4 - core index']
  #allocation1 [shape = 'u32[144,128]{1,0:T(1,128)}', space=vmem, size = 0x12000, scoped, tag = 'internal scratch']
  %s0 = inlined_call_operand.vmem [shape: bf16[2,2,128], index: 0, kind: input, shape index: {}]
  %s1 = inlined_call_operand.vmem [shape: s32[2,2,1], index: 1, kind: input, shape index: {}]
  %s2 = inlined_call_operand.hbm [shape: f32[128,128], index: 2, kind: input, shape index: {}]
  %s3 = inlined_call_operand.vmem [shape: f32[1,128], index: 3, kind: input, shape index: {}]
  %s4 = inlined_call_operand.hbm [shape: f32[128,128], index: 4, kind: input, shape index: {}]
  %s5 = inlined_call_operand.vmem [shape: f32[1,128], index: 5, kind: input, shape index: {}]
  %s6 = inlined_call_operand.hbm [shape: f32[2,128], index: 6, kind: output, shape index: {}]
  %s7 = sld [smem:[#allocation0]]
  $region42: #{tpu_custom_call.1} parent=0
    _
  %s9 = ssub.s32 1, %s7
  %s10 = scalar_select 0, %s9, %s7
  $region1: #{tpu_custom_call.1} parent=0
    #allocation2 [shape = 'u8[65536]{0}', space=vmem, size = 0x10000, scoped, tag = 'input window, operand 2, single buffered']
    #allocation3 [shape = 's32[1]{0}', space=sflag, size = 0x4, scoped, tag = 'scoped memory for tpu_custom_call.1']
    #allocation4 [shape = 's32[1]{0}', space=sflag, size = 0x4, scoped, tag = 'scoped memory for tpu_custom_call.1']
    #allocation5 [shape = 'u8[65536]{0}', space=vmem, size = 0x10000, scoped, tag = 'input window, operand 4, single buffered']
    #allocation6 [shape = 's32[1]{0}', space=sflag, size = 0x4, scoped, tag = 'scoped memory for tpu_custom_call.1']
    #allocation7 [shape = 'u8[1024]{0}', space=vmem, size = 0x400, scoped, tag = 'output window, operand 0, single buffered']
    %11 = vsyncpa [#allocation3], 0
    %12 = vsyncpa [#allocation6], 0
    %13 = vsyncpa [#allocation4], 0
    // Predicated region
    $region2: #{tpu_custom_call.1} parent=1 // pred_check
      _
    $region3: #{tpu_custom_call.1} parent=1 // pred_check_branch
      %15 = sbr.rel (0) target = $region5
    $region4: #{tpu_custom_call.1} parent=1 // pred_region
      _
    $region5: #{tpu_custom_call.1} parent=1 // pred_fallthru
      _
    // Predicated region
    $region6: #{tpu_custom_call.1} parent=1 // pred_check
      _
    $region7: #{tpu_custom_call.1} parent=1 // pred_check_branch
      %17 = sbr.rel (0) target = $region9
    $region8: #{tpu_custom_call.1} parent=1 // pred_region
      _
    $region9: #{tpu_custom_call.1} parent=1 // pred_fallthru
      _
    // Predicated region
    $region10: #{tpu_custom_call.1} parent=1 // pred_check
      _
    $region11: #{tpu_custom_call.1} parent=1 // pred_check_branch
      %19 = sbr.rel (0) target = $region13
    $region12: #{tpu_custom_call.1} parent=1 // pred_region
      %s21 = ssub.s32 2048, 2048
      %22 = vsyncadd [#allocation3], %s21
      %s23 = sshll.u32 [#allocation2], 4
      %s24 = int_to_ptr.vmem [resolvable:$true] %s23
      %29 = dma.hbm_to_vmem [thread:$0]  %s2, 2048, %s24, [#allocation3], 128, 128, 8
    $region13: #{tpu_custom_call.1} parent=1 // pred_fallthru
      _
    // Predicated region
    $region14: #{tpu_custom_call.1} parent=1 // pred_check
      _
    $region15: #{tpu_custom_call.1} parent=1 // pred_check_branch
      %31 = sbr.rel (0) target = $region17
    $region16: #{tpu_custom_call.1} parent=1 // pred_region
      _
    $region17: #{tpu_custom_call.1} parent=1 // pred_fallthru
      _
    // Predicated region
    $region18: #{tpu_custom_call.1} parent=1 // pred_check
      _
    $region19: #{tpu_custom_call.1} parent=1 // pred_check_branch
      %33 = sbr.rel (0) target = $region21
    $region20: #{tpu_custom_call.1} parent=1 // pred_region
      %s35 = ssub.s32 2048, 2048
      %36 = vsyncadd [#allocation6], %s35
      %s37 = sshll.u32 [#allocation5], 4
      %s38 = int_to_ptr.vmem [resolvable:$true] %s37
      %43 = dma.hbm_to_vmem [thread:$0]  %s4, 2048, %s38, [#allocation6], 128, 128, 8
    $region21: #{tpu_custom_call.1} parent=1 // pred_fallthru
      _
    // Predicated region
    $region22: #{tpu_custom_call.1} parent=1 // pred_check
      _
    $region23: #{tpu_custom_call.1} parent=1 // pred_check_branch
      %45 = sbr.rel (0) target = $region25
    $region24: #{tpu_custom_call.1} parent=1 // pred_region
      _
    $region25: #{tpu_custom_call.1} parent=1 // pred_fallthru
      _
    // Predicated region
    $region26: #{tpu_custom_call.1} parent=1 // pred_check
      _
    $region27: #{tpu_custom_call.1} parent=1 // pred_check_branch
      %47 = sbr.rel (0) target = $region29
    $region28: #{tpu_custom_call.1} parent=1 // pred_region
      %48 = dma.done [#allocation3], 2048
    $region29: #{tpu_custom_call.1} parent=1 // pred_fallthru
      _
    // Predicated region
    $region30: #{tpu_custom_call.1} parent=1 // pred_check
      _
    $region31: #{tpu_custom_call.1} parent=1 // pred_check_branch
      %50 = sbr.rel (0) target = $region33
    $region32: #{tpu_custom_call.1} parent=1 // pred_region
      %51 = dma.done [#allocation6], 2048
    $region33: #{tpu_custom_call.1} parent=1 // pred_fallthru
      _
    %v54 = vlaneseq
    %v55 = vand.u32 %v54, 127
    %v56 = vld [vmem:[%s1] sm:$0x3]
    %v57 = vld [vmem:[%s1 + $0x2] sm:$0x3]
    %58 = vset.pattern.permute.xlu0 0
    %59 = vperm.xlu0 %58, %v56
    %v60 = vpop.permute.xlu0 %59
    %61 = vset.pattern.permute.xlu0 0
    %62 = vperm.xlu0 %61, %v57
    %v63 = vpop.permute.xlu0 %62
    %vm64 = vcmp.lt.s32.totalorder %v55, %v60
    %vm65 = vcmp.lt.s32.totalorder %v55, %v63
    %v66 = vld [vmem:[%s0] sm:$0x1]
    %v67 = vld [vmem:[%s0 + $0x1] sm:$0x1]
    %v68 = vsel %vm64, 1, 0
    %v69 = vsel %vm65, 1, 0
    %v70 = vpack.c.b16 %v68, %v68
    %v71 = vpack.c.b16 %v69, %v69
    %vm72 = vcmp.ne.s16.totalorder %v70, 0
    %vm73 = vcmp.ne.s16.totalorder %v71, 0
    %v74 = vsel %vm72, %v66, 0
    %v75 = vsel %vm73, %v67, 0
    %v76 = vunpack.c.l.bf16 %v74
    %v77 = vunpack.c.l.bf16 %v75
    %vm78 = vcmask 1041408
    %v79 = vsel %vm78, %v76, 0.0
    %v80 = vrot.slane %v79, 4
    %v81 = vadd.f32 %v79, %v80
    %v82 = vrot.slane %v81, 2
    %v83 = vadd.f32 %v81, %v82
    %v84 = vrot.slane %v83, 1
    %v85 = vadd.f32 %v83, %v84
    %v86 = vsel %vm78, %v77, 0.0
    %v87 = vrot.slane %v86, 4
    %v88 = vadd.f32 %v86, %v87
    %v89 = vrot.slane %v88, 2
    %v90 = vadd.f32 %v88, %v89
    %v91 = vrot.slane %v90, 1
    %v92 = vadd.f32 %v90, %v91
    %v93 = vld [vmem:[#allocation2] sm:$0xff]
    %v94 = vld [vmem:[#allocation2 + $0x8] sm:$0xff]
    %v95 = vld [vmem:[#allocation2 + $0x10] sm:$0xff]
    %v96 = vld [vmem:[#allocation2 + $0x18] sm:$0xff]
    %v97 = vld [vmem:[#allocation2 + $0x20] sm:$0xff]
    %v98 = vld [vmem:[#allocation2 + $0x28] sm:$0xff]
    %v99 = vld [vmem:[#allocation2 + $0x30] sm:$0xff]
    %v100 = vld [vmem:[#allocation2 + $0x38] sm:$0xff]
    %v101 = vld [vmem:[#allocation2 + $0x40] sm:$0xff]
    %v102 = vld [vmem:[#allocation2 + $0x48] sm:$0xff]
    %v103 = vld [vmem:[#allocation2 + $0x50] sm:$0xff]
    %v104 = vld [vmem:[#allocation2 + $0x58] sm:$0xff]
    %v105 = vld [vmem:[#allocation2 + $0x60] sm:$0xff]
    %v106 = vld [vmem:[#allocation2 + $0x68] sm:$0xff]
    %v107 = vld [vmem:[#allocation2 + $0x70] sm:$0xff]
    %v108 = vld [vmem:[#allocation2 + $0x78] sm:$0xff]
    %v109 = vld [vmem:[%s3] sm:$0x1]
    %v111 = vlaneseq
    %v112 = vshrl.u32 %v111, 7
    %v113 = vsub.s32 0, %v112
    %v114 = vrot.slane %v109, %v113
    %vm118 = vcmask 1041409
    %v119 = vsel %vm118, %v92, %v85
    %121 = vmatprep.subr.mxu0 0.0
    %122 = vmatpush1.msra.mxu0 %v93
    %123 = vmatprep.subr.mxu0 0.0
    %124 = vmatpush1.msra.mxu0 %v94
    %125 = vmatprep.subr.mxu0 0.0
    %126 = vmatpush1.msra.mxu0 %v95
    %127 = vmatprep.subr.mxu0 0.0
    %128 = vmatpush1.msra.mxu0 %v96
    %129 = vmatprep.subr.mxu0 0.0
    %130 = vmatpush1.msra.mxu0 %v97
    %131 = vmatprep.subr.mxu0 0.0
    %132 = vmatpush1.msra.mxu0 %v98
    %133 = vmatprep.subr.mxu0 0.0
    %134 = vmatpush1.msra.mxu0 %v99
    %135 = vmatprep.subr.mxu0 0.0
    %136 = vmatpush1.msra.mxu0 %v100
    %137 = vmatprep.subr.mxu0 0.0
    %138 = vmatpush1.msra.mxu0 %v101
    %139 = vmatprep.subr.mxu0 0.0
    %140 = vmatpush1.msra.mxu0 %v102
    %141 = vmatprep.subr.mxu0 0.0
    %142 = vmatpush1.msra.mxu0 %v103
    %143 = vmatprep.subr.mxu0 0.0
    %144 = vmatpush1.msra.mxu0 %v104
    %145 = vmatprep.subr.mxu0 0.0
    %146 = vmatpush1.msra.mxu0 %v105
    %147 = vmatprep.subr.mxu0 0.0
    %148 = vmatpush1.msra.mxu0 %v106
    %149 = vmatprep.subr.mxu0 0.0
    %150 = vmatpush1.msra.mxu0 %v107
    %151 = vmatprep.subr.mxu0 0.0
    %152 = vmatpush1.msra.mxu0 %v108
    %153 = vmatprep.subr.mxu0 0.0
    %154 = vmatpush1.msra.mxu0 0.0
    %155 = vmatprep.subr.mxu0 0.0
    %156 = vmatpush1.msra.mxu0 0.0
    %157 = vmatprep.subr.mxu0 0.0
    %158 = vmatpush1.msra.mxu0 0.0
    %159 = vmatprep.subr.mxu0 0.0
    %160 = vmatpush1.msra.mxu0 0.0
    %161 = vmatprep.subr.mxu0 0.0
    %162 = vmatpush1.msra.mxu0 0.0
    %163 = vmatprep.subr.mxu0 0.0
    %164 = vmatpush1.msra.mxu0 0.0
    %165 = vmatprep.subr.mxu0 0.0
    %166 = vmatpush1.msra.mxu0 0.0
    %167 = vmatprep.subr.mxu0 0.0
    %168 = vmatpush1.msra.mxu0 0.0
    %169 = vmatprep.subr.mxu0 0.0
    %170 = vmatpush1.msra.mxu0 0.0
    %171 = vmatprep.subr.mxu0 0.0
    %172 = vmatpush1.msra.mxu0 0.0
    %173 = vmatprep.subr.mxu0 0.0
    %174 = vmatpush1.msra.mxu0 0.0
    %175 = vmatprep.subr.mxu0 0.0
    %176 = vmatpush1.msra.mxu0 0.0
    %177 = vmatprep.subr.mxu0 0.0
    %178 = vmatpush1.msra.mxu0 0.0
    %179 = vmatprep.subr.mxu0 0.0
    %180 = vmatpush1.msra.mxu0 0.0
    %181 = vmatprep.subr.mxu0 0.0
    %182 = vmatpush1.msra.mxu0 0.0
    %183 = vmatprep.subr.mxu0 0.0
    %184 = vmatpush1.msra.mxu0 0.0
    %185 = vmatprep.mubr.f32.mxu0 0.0
    %186 = vmatmul.mubr.f32.gmra.mrb[0].mxu0 %v119
    %v187 = vpop.f32.mrb[0].mxu0
    %v188 = vadd.f32 %v114, %v187
    %v189 = vpop.f32.mrb[0].mxu0
    %190 = vdwg.mxu0
    %vm191 = vcmp.gt.f32.partialorder %v188, 0.0
    %v192 = vmul.f32 %v188, 0.01
    %v193 = vsel %vm191, %v188, %v192
    %v194 = vld [vmem:[#allocation5] sm:$0xff]
    %v195 = vld [vmem:[#allocation5 + $0x8] sm:$0xff]
    %v196 = vld [vmem:[#allocation5 + $0x10] sm:$0xff]
    %v197 = vld [vmem:[#allocation5 + $0x18] sm:$0xff]
    %v198 = vld [vmem:[#allocation5 + $0x20] sm:$0xff]
    %v199 = vld [vmem:[#allocation5 + $0x28] sm:$0xff]
    %v200 = vld [vmem:[#allocation5 + $0x30] sm:$0xff]
    %v201 = vld [vmem:[#allocation5 + $0x38] sm:$0xff]
    %v202 = vld [vmem:[#allocation5 + $0x40] sm:$0xff]
    %v203 = vld [vmem:[#allocation5 + $0x48] sm:$0xff]
    %v204 = vld [vmem:[#allocation5 + $0x50] sm:$0xff]
    %v205 = vld [vmem:[#allocation5 + $0x58] sm:$0xff]
    %v206 = vld [vmem:[#allocation5 + $0x60] sm:$0xff]
    %v207 = vld [vmem:[#allocation5 + $0x68] sm:$0xff]
    %v208 = vld [vmem:[#allocation5 + $0x70] sm:$0xff]
    %v209 = vld [vmem:[#allocation5 + $0x78] sm:$0xff]
    %v210 = vld [vmem:[%s5] sm:$0x1]
    %v212 = vlaneseq
    %v213 = vshrl.u32 %v212, 7
    %v214 = vsub.s32 0, %v213
    %v215 = vrot.slane %v210, %v214
    %217 = vmatprep.subr.mxu0 0.0
    %218 = vmatpush1.msra.mxu0 %v194
    %219 = vmatprep.subr.mxu0 0.0
    %220 = vmatpush1.msra.mxu0 %v195
    %221 = vmatprep.subr.mxu0 0.0
    %222 = vmatpush1.msra.mxu0 %v196
    %223 = vmatprep.subr.mxu0 0.0
    %224 = vmatpush1.msra.mxu0 %v197
    %225 = vmatprep.subr.mxu0 0.0
    %226 = vmatpush1.msra.mxu0 %v198
    %227 = vmatprep.subr.mxu0 0.0
    %228 = vmatpush1.msra.mxu0 %v199
    %229 = vmatprep.subr.mxu0 0.0
    %230 = vmatpush1.msra.mxu0 %v200
    %231 = vmatprep.subr.mxu0 0.0
    %232 = vmatpush1.msra.mxu0 %v201
    %233 = vmatprep.subr.mxu0 0.0
    %234 = vmatpush1.msra.mxu0 %v202
    %235 = vmatprep.subr.mxu0 0.0
    %236 = vmatpush1.msra.mxu0 %v203
    %237 = vmatprep.subr.mxu0 0.0
    %238 = vmatpush1.msra.mxu0 %v204
    %239 = vmatprep.subr.mxu0 0.0
    %240 = vmatpush1.msra.mxu0 %v205
    %241 = vmatprep.subr.mxu0 0.0
    %242 = vmatpush1.msra.mxu0 %v206
    %243 = vmatprep.subr.mxu0 0.0
    %244 = vmatpush1.msra.mxu0 %v207
    %245 = vmatprep.subr.mxu0 0.0
    %246 = vmatpush1.msra.mxu0 %v208
    %247 = vmatprep.subr.mxu0 0.0
    %248 = vmatpush1.msra.mxu0 %v209
    %249 = vmatprep.subr.mxu0 0.0
    %250 = vmatpush1.msra.mxu0 0.0
    %251 = vmatprep.subr.mxu0 0.0
    %252 = vmatpush1.msra.mxu0 0.0
    %253 = vmatprep.subr.mxu0 0.0
    %254 = vmatpush1.msra.mxu0 0.0
    %255 = vmatprep.subr.mxu0 0.0
    %256 = vmatpush1.msra.mxu0 0.0
    %257 = vmatprep.subr.mxu0 0.0
    %258 = vmatpush1.msra.mxu0 0.0
    %259 = vmatprep.subr.mxu0 0.0
    %260 = vmatpush1.msra.mxu0 0.0
    %261 = vmatprep.subr.mxu0 0.0
    %262 = vmatpush1.msra.mxu0 0.0
    %263 = vmatprep.subr.mxu0 0.0
    %264 = vmatpush1.msra.mxu0 0.0
    %265 = vmatprep.subr.mxu0 0.0
    %266 = vmatpush1.msra.mxu0 0.0
    %267 = vmatprep.subr.mxu0 0.0
    %268 = vmatpush1.msra.mxu0 0.0
    %269 = vmatprep.subr.mxu0 0.0
    %270 = vmatpush1.msra.mxu0 0.0
    %271 = vmatprep.subr.mxu0 0.0
    %272 = vmatpush1.msra.mxu0 0.0
    %273 = vmatprep.subr.mxu0 0.0
    %274 = vmatpush1.msra.mxu0 0.0
    %275 = vmatprep.subr.mxu0 0.0
    %276 = vmatpush1.msra.mxu0 0.0
    %277 = vmatprep.subr.mxu0 0.0
    %278 = vmatpush1.msra.mxu0 0.0
    %279 = vmatprep.subr.mxu0 0.0
    %280 = vmatpush1.msra.mxu0 0.0
    %281 = vmatprep.mubr.f32.mxu0 0.0
    %282 = vmatmul.mubr.f32.gmra.mrb[0].mxu0 %v193
    %v283 = vpop.f32.mrb[0].mxu0
    %v284 = vadd.f32 %v215, %v283
    %v285 = vpop.f32.mrb[0].mxu0
    %286 = vdwg.mxu0
    %287 = vst [vmem:[#allocation7] sm:$0x3] %v284
    // Predicated region
    $region34: #{tpu_custom_call.1} parent=1 // pred_check
      _
    $region35: #{tpu_custom_call.1} parent=1 // pred_check_branch
      %289 = sbr.rel (0) target = $region37
    $region36: #{tpu_custom_call.1} parent=1 // pred_region
      %s291 = ssub.s32 32, 32
      %292 = vsyncadd [#allocation4], %s291
      %s294 = sshll.u32 [#allocation7], 4
      %s295 = int_to_ptr.vmem [resolvable:$true] %s294
      %297 = dma.vmem_to_hbm [thread:$0]  %s295, 32, %s6, [#allocation4]
    $region37: #{tpu_custom_call.1} parent=1 // pred_fallthru
      _
    // Predicated region
    $region38: #{tpu_custom_call.1} parent=1 // pred_check
      _
    $region39: #{tpu_custom_call.1} parent=1 // pred_check_branch
      %299 = sbr.rel (0) target = $region41
    $region40: #{tpu_custom_call.1} parent=1 // pred_region
      %300 = dma.done [#allocation4], 32
    $region41: #{tpu_custom_call.1} parent=1 // pred_fallthru
      _
    %301 = vsyncpa [#allocation3], 1
    %302 = vsyncpa [#allocation6], 1
    %303 = vsyncpa [#allocation4], 1

</llo_original>
